<compile_context>
chip_gen: v7x
topology: tpu7x:2x2x1
jax: 0.10.0
libtpu: 0.0.40
codegen_flags: <defaults>
</compile_context>

<pallas_src>
import jax
import jax.numpy as jnp
from jax import lax
from jax.experimental import pallas as pl
from jax.experimental.pallas import tpu as pltpu

_BIG = 1e30          # "excluded from min" sentinel (safe in f32)
_EPS = 1e-12         # matches torch .clamp(min=1e-12)
# Set to jnp.bfloat16 on v5e/v6e to trade a little accuracy for MXU rate;
# the elementwise / reduction path always stays f32.
_MXU_DTYPE = jnp.float32
_VMEM_LIMIT = 32 * 1024 * 1024


def _pick_row_tile(n):
    for tm in (512, 256, 128):
        if n % tm == 0:
            return tm
    return n                      # small / awkward sizes: single row tile


def _global_stats_kernel(xr_ref, xc_ref, tr_ref, tc_ref, out_ref):
    """Hardest-positive / hardest-negative distance for one row tile.

    xr_ref : (TM, D) f32  row tile of features
    xc_ref : (N,  D) f32  all features (resident column operand)
    tr_ref : (TM, 1) i32  row labels
    tc_ref : (1,  N) i32  column labels
    out_ref: (TM, 2) f32  packed [dist_ap | dist_an]
    """
    xr = xr_ref[...]
    xc = xc_ref[...]
    sq_r = jnp.sum(xr * xr, axis=1, keepdims=True)                  # (TM, 1)
    sq_c = jnp.sum(xc * xc, axis=1, keepdims=True)                  # (N, 1)
    gram = lax.dot_general(
        xr.astype(_MXU_DTYPE), xc.astype(_MXU_DTYPE),
        dimension_numbers=(((1,), (1,)), ((), ())),
        preferred_element_type=jnp.float32)                         # MXU, (TM, N)
    dist2 = sq_r + jnp.transpose(sq_c) - 2.0 * gram
    dist = jnp.sqrt(jnp.maximum(dist2, _EPS))                       # (TM, N)

    same = tr_ref[...] == tc_ref[...]                               # (TM, N) VPU compare
    # dist >= sqrt(eps) > 0 and the diagonal is always same-label, so 0.0 is a
    # safe "-inf" for the masked max; masked min uses the _BIG sentinel.
    ap = jnp.max(jnp.where(same, dist, 0.0), axis=1, keepdims=True)
    an = jnp.min(jnp.where(same, _BIG, dist), axis=1, keepdims=True)
    out_ref[...] = jnp.concatenate([ap, an], axis=1)


def _intra_stats_kernel(xr_ref, xc_ref, tra_ref, trb_ref, tc0_ref, tc1_ref,
                        out_ref):
    """Intra-modality stats exploiting the cat(F, F) replication.

    For feat_all = cat(F, F) (F = one modality half with H rows) the (2H, 2H)
    distance matrix is a 2x2 tiling of the (H, H) F-vs-F distances.  Row i and
    row i+H of the full matrix share one distance row but use row labels t[i]
    and t[i+H]; columns j and j+H collapse onto column (j mod H) with labels
    t[j] / t[j+H] OR-ed together.

    xr_ref : (TH, D) row tile of this modality's features
    xc_ref : (H,  D) all rows of this modality's features
    tra_ref: (TH, 1) first-half row labels   (rows 0..H-1 of the full matrix)
    trb_ref: (TH, 1) second-half row labels  (rows H..2H-1)
    tc0_ref: (1,  H) first-half column labels
    tc1_ref: (1,  H) second-half column labels
    out_ref: (TH, 4) packed [ap_A | an_A | ap_B | an_B]
    """
    xr = xr_ref[...]
    xc = xc_ref[...]
    sq_r = jnp.sum(xr * xr, axis=1, keepdims=True)                  # (TH, 1)
    sq_c = jnp.sum(xc * xc, axis=1, keepdims=True)                  # (H, 1)
    gram = lax.dot_general(
        xr.astype(_MXU_DTYPE), xc.astype(_MXU_DTYPE),
        dimension_numbers=(((1,), (1,)), ((), ())),
        preferred_element_type=jnp.float32)                         # (TH, H)
    dist2 = sq_r + jnp.transpose(sq_c) - 2.0 * gram
    dist = jnp.sqrt(jnp.maximum(dist2, _EPS))

    tc0 = tc0_ref[...]
    tc1 = tc1_ref[...]

    def _stats(tr):                                                 # tr: (TH, 1)
        same = (tr == tc0) | (tr == tc1)   # a same-label copy exists in that column
        diff = (tr != tc0) | (tr != tc1)   # a diff-label copy exists in that column
        ap = jnp.max(jnp.where(same, dist, 0.0), axis=1, keepdims=True)
        an = jnp.min(jnp.where(diff, dist, _BIG), axis=1, keepdims=True)
        return ap, an

    ap_a, an_a = _stats(tra_ref[...])
    ap_b, an_b = _stats(trb_ref[...])
    out_ref[...] = jnp.concatenate([ap_a, an_a, ap_b, an_b], axis=1)


def global_tri_stats(x, targets):
    """(dist_ap, dist_an), each (N,), over the full batch."""
    n, d = x.shape
    tm = _pick_row_tile(n)
    x = x.astype(jnp.float32)
    t = targets.astype(jnp.int32)
    t_row = t.reshape(n, 1)
    t_col = t.reshape(1, n)
    cost = pl.CostEstimate(
        flops=2 * n * n * d, transcendentals=n * n,
        bytes_accessed=int(2 * n * d * 4 + 2 * n * 4 + n * 2 * 4))
    out = pl.pallas_call(
        _global_stats_kernel,
        out_shape=jax.ShapeDtypeStruct((n, 2), jnp.float32),
        grid=(n // tm,),
        in_specs=[
            pl.BlockSpec((tm, d), lambda i: (i, 0)),     # row tile of features
            pl.BlockSpec((n, d), lambda i: (0, 0)),      # resident column operand
            pl.BlockSpec((tm, 1), lambda i: (i, 0)),     # row labels
            pl.BlockSpec((1, n), lambda i: (0, 0)),      # column labels
        ],
        out_specs=pl.BlockSpec((tm, 2), lambda i: (i, 0)),
        compiler_params=pltpu.CompilerParams(
            dimension_semantics=("parallel",),
            vmem_limit_bytes=_VMEM_LIMIT),
        cost_estimate=cost,
    )(x, x, t_row, t_col)
    return out[:, 0], out[:, 1]


def intra_tri_stats(x, targets):
    """Per-modality hardest-positive/negative stats, shape (2, H, 4).

    Modality 0 = V (first half of inputs), 1 = T (second half).
    [:, :, 0] / [:, :, 1]  -> ap / an for rows 0..H-1  of cat(F, F)
    [:, :, 2] / [:, :, 3]  -> ap / an for rows H..2H-1 of cat(F, F)
    """
    n, d = x.shape
    h = n // 2
    th = _pick_row_tile(h)
    x3 = x.astype(jnp.float32).reshape(2, h, d)          # metadata-only reshape
    t = targets.astype(jnp.int32)
    tra = t[:h].reshape(h, 1)
    trb = t[h:].reshape(h, 1)
    tc0 = t[:h].reshape(1, h)
    tc1 = t[h:].reshape(1, h)
    cost = pl.CostEstimate(
        flops=2 * (2 * h * h * d), transcendentals=2 * h * h,
        bytes_accessed=int(2 * n * d * 4 + 4 * h * 4 + 2 * h * 4 * 4))
    return pl.pallas_call(
        _intra_stats_kernel,
        out_shape=jax.ShapeDtypeStruct((2, h, 4), jnp.float32),
        grid=(2, h // th),
        in_specs=[
            pl.BlockSpec((None, th, d), lambda m, i: (m, i, 0)),  # row tile, modality m
            pl.BlockSpec((None, h, d), lambda m, i: (m, 0, 0)),   # all rows, modality m
            pl.BlockSpec((th, 1), lambda m, i: (i, 0)),           # first-half row labels
            pl.BlockSpec((th, 1), lambda m, i: (i, 0)),           # second-half row labels
            pl.BlockSpec((1, h), lambda m, i: (0, 0)),            # first-half col labels
            pl.BlockSpec((1, h), lambda m, i: (0, 0)),            # second-half col labels
        ],
        out_specs=pl.BlockSpec((None, th, 4), lambda m, i: (m, i, 0)),
        compiler_params=pltpu.CompilerParams(
            dimension_semantics=("parallel", "parallel"),
            vmem_limit_bytes=_VMEM_LIMIT),
        cost_estimate=cost,
    )(x3, x3, tra, trb, tc0, tc1)


def _margin_ranking_loss(x1, x2, margin):
    # nn.MarginRankingLoss(margin)(x1, x2, y=1), reduction='mean':
    #   mean(max(0, -(x1 - x2) + margin))
    return jnp.mean(jnp.maximum(0.0, -(x1 - x2) + margin))


def dc_loss(inputs, targets, margin=0.3):
    """Forward pass of DCLoss.

    inputs : (N, D) float features, first half = modality V, second half = T.
    targets: (N,)   integer labels.
    Returns (loss, correct); loss = loss_V_tri + loss_T_tri exactly as in the
    reference (loss_tri is computed only to match the reference / derive
    `correct`).  All three same-label masks use the ORIGINAL targets, as in
    the PyTorch spec.
    """
    # --- global triplet stats (drive `correct`; loss_tri unused in `loss`) ---
    dist_ap, dist_an = global_tri_stats(inputs, targets)
    _loss_tri = _margin_ranking_loss(dist_an, dist_ap, margin)   # parity only
    correct = jnp.sum((dist_an >= dist_ap).astype(jnp.int32))

    # --- intra-modality V / T (single fused, replication-exploiting call) ----
    stats = intra_tri_stats(inputs, targets)                     # (2, H, 4)
    ap_v = jnp.concatenate([stats[0, :, 0], stats[0, :, 2]])
    an_v = jnp.concatenate([stats[0, :, 1], stats[0, :, 3]])
    ap_t = jnp.concatenate([stats[1, :, 0], stats[1, :, 2]])
    an_t = jnp.concatenate([stats[1, :, 1], stats[1, :, 3]])
    loss_v_tri = _margin_ranking_loss(an_v, ap_v, 0.1)
    loss_t_tri = _margin_ranking_loss(an_t, ap_t, 0.1)

    loss = loss_v_tri + loss_t_tri
    # TODO(synk): the reference returns `correct` as a Python int via .item();
    # here it stays a JAX scalar.
    return loss, correct


if __name__ == "__main__":
    key = jax.random.PRNGKey(0)
    N, D = 8, 32  # batch of 8 (4 visible + 4 thermal), 32-dim features
    k1, _ = jax.random.split(key)
    inputs = jax.random.normal(k1, (N, D), dtype=jnp.float32)
    # cross-modal labels: identities 0..3 appear once in each modality half
    targets = jnp.array([0, 1, 2, 3, 0, 1, 2, 3], dtype=jnp.int32)

    loss, correct = dc_loss(inputs, targets, margin=0.3)
    jax.block_until_ready((loss, correct))
    print("KERNEL_OK")
</pallas_src>

<mosaic_0001>
module attributes {stable_mosaic.version = 11 : i64} {
  func.func @_global_stats_kernel(%arg0: i32, %arg1: memref<8x32xf32, #tpu.memory_space<vmem>>, %arg2: memref<8x32xf32, #tpu.memory_space<vmem>>, %arg3: memref<8x1xi32, #tpu.memory_space<vmem>>, %arg4: memref<1x8xi32, #tpu.memory_space<vmem>>, %arg5: memref<8x2xf32, #tpu.memory_space<vmem>>) attributes {dimension_semantics = [#tpu.dimension_semantics<parallel>], iteration_bounds = array<i64: 1>, scalar_prefetch = 0 : i64, scratch_operands = 0 : i64, tpu.core_type = #tpu.core_type<tc>, window_params = [{transform_indices = @transform_0, window_bounds = array<i64: 8, 32>}, {pipeline_mode = #tpu.pipeline_mode<synchronous>, transform_indices = @transform_1, window_bounds = array<i64: 8, 32>}, {transform_indices = @transform_2, window_bounds = array<i64: 8, 1>}, {pipeline_mode = #tpu.pipeline_mode<synchronous>, transform_indices = @transform_3, window_bounds = array<i64: 1, 8>}, {transform_indices = @transform_4, window_bounds = array<i64: 8, 2>}]} {
    %c0 = arith.constant 0 : index
    %c0_0 = arith.constant 0 : index
    %0 = vector.load %arg1[%c0, %c0_0] : memref<8x32xf32, #tpu.memory_space<vmem>>, vector<8x32xf32>
    %c0_1 = arith.constant 0 : index
    %c0_2 = arith.constant 0 : index
    %1 = vector.load %arg2[%c0_1, %c0_2] : memref<8x32xf32, #tpu.memory_space<vmem>>, vector<8x32xf32>
    %2 = arith.mulf %0, %0 : vector<8x32xf32>
    %cst = arith.constant dense<0.000000e+00> : vector<8xf32>
    %3 = vector.multi_reduction <add>, %2, %cst [1] : vector<8x32xf32> to vector<8xf32>
    %4 = vector.shape_cast %3 : vector<8xf32> to vector<8x1xf32>
    %5 = arith.mulf %1, %1 : vector<8x32xf32>
    %cst_3 = arith.constant dense<0.000000e+00> : vector<8xf32>
    %6 = vector.multi_reduction <add>, %5, %cst_3 [1] : vector<8x32xf32> to vector<8xf32>
    %7 = vector.shape_cast %6 : vector<8xf32> to vector<8x1xf32>
    %cst_4 = arith.constant dense<0.000000e+00> : vector<8x8xf32>
    %8 = tpu.matmul %0, %1, %cst_4 {dimension_numbers = #tpu.dot_dimension_numbers<[1], [1], [0], [0], [0, 0, 1, 0], [], []>} : vector<8x32xf32>, vector<8x32xf32>, vector<8x8xf32> -> vector<8x8xf32>
    %9 = tpu.transpose %7, [1, 0] : vector<8x1xf32> -> vector<1x8xf32>
    %10 = vector.broadcast %4 : vector<8x1xf32> to vector<8x8xf32>
    %11 = vector.broadcast %9 : vector<1x8xf32> to vector<8x8xf32>
    %12 = arith.addf %10, %11 : vector<8x8xf32>
    %cst_5 = arith.constant 2.000000e+00 : f32
    %13 = vector.broadcast %cst_5 : f32 to vector<8x8xf32>
    %14 = arith.mulf %13, %8 : vector<8x8xf32>
    %15 = arith.subf %12, %14 : vector<8x8xf32>
    %cst_6 = arith.constant 9.99999996E-13 : f32
    %16 = vector.broadcast %cst_6 : f32 to vector<8x8xf32>
    %17 = arith.maximumf %15, %16 : vector<8x8xf32>
    %18 = math.sqrt %17 : vector<8x8xf32>
    %c0_7 = arith.constant 0 : index
    %c0_8 = arith.constant 0 : index
    %19 = vector.load %arg3[%c0_7, %c0_8] : memref<8x1xi32, #tpu.memory_space<vmem>>, vector<8x1xi32>
    %c0_9 = arith.constant 0 : index
    %c0_10 = arith.constant 0 : index
    %20 = vector.load %arg4[%c0_9, %c0_10] : memref<1x8xi32, #tpu.memory_space<vmem>>, vector<1x8xi32>
    %21 = vector.broadcast %19 : vector<8x1xi32> to vector<8x8xi32>
    %22 = vector.broadcast %20 : vector<1x8xi32> to vector<8x8xi32>
    %23 = arith.cmpi eq, %21, %22 : vector<8x8xi32>
    %cst_11 = arith.constant 0.000000e+00 : f32
    %24 = vector.broadcast %cst_11 : f32 to vector<8x8xf32>
    %25 = arith.select %23, %18, %24 : vector<8x8xi1>, vector<8x8xf32>
    %cst_12 = arith.constant dense<0xFF800000> : vector<8xf32>
    %26 = vector.multi_reduction <maximumf>, %25, %cst_12 [1] : vector<8x8xf32> to vector<8xf32>
    %27 = vector.shape_cast %26 : vector<8xf32> to vector<8x1xf32>
    %cst_13 = arith.constant 1.000000e+30 : f32
    %28 = vector.broadcast %cst_13 : f32 to vector<8x8xf32>
    %29 = arith.select %23, %28, %18 : vector<8x8xi1>, vector<8x8xf32>
    %cst_14 = arith.constant dense<0x7F800000> : vector<8xf32>
    %30 = vector.multi_reduction <minimumf>, %29, %cst_14 [1] : vector<8x8xf32> to vector<8xf32>
    %31 = vector.shape_cast %30 : vector<8xf32> to vector<8x1xf32>
    %32 = tpu.concatenate %27, %31 in 1 : vector<8x1xf32>, vector<8x1xf32> -> vector<8x2xf32>
    %c0_15 = arith.constant 0 : index
    %c0_16 = arith.constant 0 : index
    %33 = vector.load %arg5[%c0_15, %c0_16] : memref<8x2xf32, #tpu.memory_space<vmem>>, vector<8x2xf32>
    tpu.vector_store %arg5[%c0_15, %c0_16], %32 {strides = array<i32>} : memref<8x2xf32, #tpu.memory_space<vmem>>, vector<8x2xf32>,
    return
  }
  func.func @transform_0(%arg0: i32) -> (i32, i32) {
    %c0_i32 = arith.constant 0 : i32
    %c0_i32_0 = arith.constant 0 : i32
    return %arg0, %c0_i32 : i32, i32
  }
  func.func @transform_1(%arg0: i32) -> (i32, i32) {
    %c0_i32 = arith.constant 0 : i32
    %c0_i32_0 = arith.constant 0 : i32
    %c0_i32_1 = arith.constant 0 : i32
    return %c0_i32, %c0_i32_0 : i32, i32
  }
  func.func @transform_2(%arg0: i32) -> (i32, i32) {
    %c0_i32 = arith.constant 0 : i32
    %c0_i32_0 = arith.constant 0 : i32
    return %arg0, %c0_i32 : i32, i32
  }
  func.func @transform_3(%arg0: i32) -> (i32, i32) {
    %c0_i32 = arith.constant 0 : i32
    %c0_i32_0 = arith.constant 0 : i32
    %c0_i32_1 = arith.constant 0 : i32
    return %c0_i32, %c0_i32_0 : i32, i32
  }
  func.func @transform_4(%arg0: i32) -> (i32, i32) {
    %c0_i32 = arith.constant 0 : i32
    %c0_i32_0 = arith.constant 0 : i32
    return %arg0, %c0_i32 : i32, i32
  }
}

</mosaic_0001>

<llo_original>
// kernel: tpu_custom_call.1
$region0: #{tpu_custom_call.1}
  #allocation0 [shape = 'u32[]', space=smem, size = 0x4, offset = 0x4, fixed_abs, tag = 'smem constant byte address 0x4 - core index']
  #allocation1 [shape = 'u32[144,128]{1,0:T(1,128)}', space=vmem, size = 0x12000, scoped, tag = 'internal scratch']
  %s0 = inlined_call_operand.vmem [shape: f32[8,32], index: 0, kind: input, shape index: {}]
  %s1 = inlined_call_operand.hbm [shape: f32[8,32], index: 1, kind: input, shape index: {}]
  %s2 = inlined_call_operand.vmem [shape: s32[8,1], index: 2, kind: input, shape index: {}]
  %s3 = inlined_call_operand.vmem [shape: s32[1,8], index: 3, kind: input, shape index: {}]
  %s4 = inlined_call_operand.vmem [shape: f32[8,2], index: 4, kind: output, shape index: {}]
  %s5 = sld [smem:[#allocation0]]
  $region30: #{tpu_custom_call.1} parent=0
    _
  %s7 = ssub.s32 1, %s5
  %s8 = scalar_select 0, %s7, %s5
  $region1: #{tpu_custom_call.1} parent=0
    #allocation2 [shape = 'u8[4096]{0}', space=vmem, size = 0x1000, scoped, tag = 'input window, operand 1, single buffered']
    #allocation3 [shape = 's32[1]{0}', space=sflag, size = 0x4, scoped, tag = 'scoped memory for tpu_custom_call.1']
    %9 = vsyncpa [#allocation3], 0
    // Predicated region
    $region2: #{tpu_custom_call.1} parent=1 // pred_check
      _
    $region3: #{tpu_custom_call.1} parent=1 // pred_check_branch
      %11 = sbr.rel (0) target = $region5
    $region4: #{tpu_custom_call.1} parent=1 // pred_region
      _
    $region5: #{tpu_custom_call.1} parent=1 // pred_fallthru
      _
    // Predicated region
    $region6: #{tpu_custom_call.1} parent=1 // pred_check
      _
    $region7: #{tpu_custom_call.1} parent=1 // pred_check_branch
      %13 = sbr.rel (0) target = $region9
    $region8: #{tpu_custom_call.1} parent=1 // pred_region
      %s15 = ssub.s32 128, 128
      %16 = vsyncadd [#allocation3], %s15
      %s18 = sshll.u32 [#allocation2], 4
      %s19 = int_to_ptr.vmem [resolvable:$true] %s18
      %21 = dma.hbm_to_vmem [thread:$0]  %s1, 128, %s19, [#allocation3]
    $region9: #{tpu_custom_call.1} parent=1 // pred_fallthru
      _
    // Predicated region
    $region10: #{tpu_custom_call.1} parent=1 // pred_check
      _
    $region11: #{tpu_custom_call.1} parent=1 // pred_check_branch
      %23 = sbr.rel (0) target = $region13
    $region12: #{tpu_custom_call.1} parent=1 // pred_region
      _
    $region13: #{tpu_custom_call.1} parent=1 // pred_fallthru
      _
    // Predicated region
    $region14: #{tpu_custom_call.1} parent=1 // pred_check
      _
    $region15: #{tpu_custom_call.1} parent=1 // pred_check_branch
      %25 = sbr.rel (0) target = $region17
    $region16: #{tpu_custom_call.1} parent=1 // pred_region
      _
    $region17: #{tpu_custom_call.1} parent=1 // pred_fallthru
      _
    // Predicated region
    $region18: #{tpu_custom_call.1} parent=1 // pred_check
      _
    $region19: #{tpu_custom_call.1} parent=1 // pred_check_branch
      %27 = sbr.rel (0) target = $region21
    $region20: #{tpu_custom_call.1} parent=1 // pred_region
      %28 = dma.done [#allocation3], 128
    $region21: #{tpu_custom_call.1} parent=1 // pred_fallthru
      _
    %v29 = vld [vmem:[%s0] sm:$0xff]
    %v30 = vld [vmem:[#allocation2] sm:$0xff]
    %v31 = vmul.f32 %v29, %v29
    %vm32 = vcmask 261120
    %v33 = vsel %vm32, %v31, 0.0
    %34 = vadd.xlane.f32.xlu0 %v33
    %v35 = vpop.xlane.xlu0 %34
    %v36 = vmul.f32 %v30, %v30
    %v37 = vsel %vm32, %v36, 0.0
    %38 = vadd.xlane.f32.xlu0 %v37
    %v39 = vpop.xlane.xlu0 %38
    %v41 = vsel %vm32, %v29, 0
    %v44 = vsel %vm32, %v30, 0
    %46 = vmatprep.subr.mxu0 0.0
    %47 = vmatpush1.xpose.msra.mxu0 %v44
    %48 = vmatprep.subr.mxu0 0.0
    %49 = vmatpush1.xpose.msra.mxu0 0.0
    %50 = vmatprep.subr.mxu0 0.0
    %51 = vmatpush1.xpose.msra.mxu0 0.0
    %52 = vmatprep.subr.mxu0 0.0
    %53 = vmatpush1.xpose.msra.mxu0 0.0
    %54 = vmatprep.subr.mxu0 0.0
    %55 = vmatpush1.xpose.msra.mxu0 0.0
    %56 = vmatprep.subr.mxu0 0.0
    %57 = vmatpush1.xpose.msra.mxu0 0.0
    %58 = vmatprep.subr.mxu0 0.0
    %59 = vmatpush1.xpose.msra.mxu0 0.0
    %60 = vmatprep.subr.mxu0 0.0
    %61 = vmatpush1.xpose.msra.mxu0 0.0
    %62 = vmatprep.subr.mxu0 0.0
    %63 = vmatpush1.xpose.msra.mxu0 0.0
    %64 = vmatprep.subr.mxu0 0.0
    %65 = vmatpush1.xpose.msra.mxu0 0.0
    %66 = vmatprep.subr.mxu0 0.0
    %67 = vmatpush1.xpose.msra.mxu0 0.0
    %68 = vmatprep.subr.mxu0 0.0
    %69 = vmatpush1.xpose.msra.mxu0 0.0
    %70 = vmatprep.subr.mxu0 0.0
    %71 = vmatpush1.xpose.msra.mxu0 0.0
    %72 = vmatprep.subr.mxu0 0.0
    %73 = vmatpush1.xpose.msra.mxu0 0.0
    %74 = vmatprep.subr.mxu0 0.0
    %75 = vmatpush1.xpose.msra.mxu0 0.0
    %76 = vmatprep.subr.mxu0 0.0
    %77 = vmatpush1.xpose.msra.mxu0 0.0
    %78 = vmatprep.subr.mxu0 0.0
    %79 = vmatpush1.xpose.msra.mxu0 0.0
    %80 = vmatprep.subr.mxu0 0.0
    %81 = vmatpush1.xpose.msra.mxu0 0.0
    %82 = vmatprep.subr.mxu0 0.0
    %83 = vmatpush1.xpose.msra.mxu0 0.0
    %84 = vmatprep.subr.mxu0 0.0
    %85 = vmatpush1.xpose.msra.mxu0 0.0
    %86 = vmatprep.subr.mxu0 0.0
    %87 = vmatpush1.xpose.msra.mxu0 0.0
    %88 = vmatprep.subr.mxu0 0.0
    %89 = vmatpush1.xpose.msra.mxu0 0.0
    %90 = vmatprep.subr.mxu0 0.0
    %91 = vmatpush1.xpose.msra.mxu0 0.0
    %92 = vmatprep.subr.mxu0 0.0
    %93 = vmatpush1.xpose.msra.mxu0 0.0
    %94 = vmatprep.subr.mxu0 0.0
    %95 = vmatpush1.xpose.msra.mxu0 0.0
    %96 = vmatprep.subr.mxu0 0.0
    %97 = vmatpush1.xpose.msra.mxu0 0.0
    %98 = vmatprep.subr.mxu0 0.0
    %99 = vmatpush1.xpose.msra.mxu0 0.0
    %100 = vmatprep.subr.mxu0 0.0
    %101 = vmatpush1.xpose.msra.mxu0 0.0
    %102 = vmatprep.subr.mxu0 0.0
    %103 = vmatpush1.xpose.msra.mxu0 0.0
    %104 = vmatprep.subr.mxu0 0.0
    %105 = vmatpush1.xpose.msra.mxu0 0.0
    %106 = vmatprep.subr.mxu0 0.0
    %107 = vmatpush1.xpose.msra.mxu0 0.0
    %108 = vmatprep.subr.mxu0 0.0
    %109 = vmatpush1.xpose.msra.mxu0 0.0
    %110 = vmatprep.mubr.f32.mxu0 0.0
    %111 = vmatmul.mubr.f32.gmra.mrb[0].mxu0 %v41
    %v112 = vpop.f32.mrb[0].mxu0
    %v113 = vadd.f32 0.0, %v112
    %v114 = vpop.f32.mrb[0].mxu0
    %115 = vdwg.mxu0
    %116 = vxpose.xlu0.b32.start [1/16] %v39, 128
    %117 = vxpose.xlu0.b32.cont [2/16] 0.0, 128
    %118 = vxpose.xlu0.b32.cont [3/16] 0.0, 128
    %119 = vxpose.xlu0.b32.cont [4/16] 0.0, 128
    %120 = vxpose.xlu0.b32.cont [5/16] 0.0, 128
    %121 = vxpose.xlu0.b32.cont [6/16] 0.0, 128
    %122 = vxpose.xlu0.b32.cont [7/16] 0.0, 128
    %123 = vxpose.xlu0.b32.cont [8/16] 0.0, 128
    %124 = vxpose.xlu0.b32.cont [9/16] 0.0, 128
    %125 = vxpose.xlu0.b32.cont [10/16] 0.0, 128
    %126 = vxpose.xlu0.b32.cont [11/16] 0.0, 128
    %127 = vxpose.xlu0.b32.cont [12/16] 0.0, 128
    %128 = vxpose.xlu0.b32.cont [13/16] 0.0, 128
    %129 = vxpose.xlu0.b32.cont [14/16] 0.0, 128
    %130 = vxpose.xlu0.b32.cont [15/16] 0.0, 128
    %131 = vxpose.xlu0.b32.end [16/16] 0.0, 128
    %v132 = vpop.trf.xlu0
    %v133 = vpop.trf.xlu0
    %v134 = vpop.trf.xlu0
    %v135 = vpop.trf.xlu0
    %v136 = vpop.trf.xlu0
    %v137 = vpop.trf.xlu0
    %v138 = vpop.trf.xlu0
    %v139 = vpop.trf.xlu0
    %v140 = vpop.trf.xlu0
    %v141 = vpop.trf.xlu0
    %v142 = vpop.trf.xlu0
    %v143 = vpop.trf.xlu0
    %v144 = vpop.trf.xlu0
    %v145 = vpop.trf.xlu0
    %v146 = vpop.trf.xlu0
    %v147 = vpop.trf.xlu0
    %v148 = vlaneseq
    %v149 = vshrl.u32 %v148, 7
    %v150 = vsub.s32 0, %v149
    %v151 = vrot.slane %v132, %v150
    %v152 = vadd.f32 %v35, %v151
    %v153 = vmul.f32 %v113, 2.0
    %v154 = vsub.f32 %v152, %v153
    %v155 = vmax.f32 %v154, 1e-12
    %v156 = vrsqrt.pop %v155
    %v157 = vmul.f32 %v155, %v156
    %vm158 = vcmp.eq.f32.partialorder %v155, inf
    %v159 = vsel %vm158, %v155, %v157
    %vm160 = vcmp.eq.f32.partialorder %v155, 0.0
    %v161 = vand.u32 %v155, 2147483648
    %v162 = vsel %vm160, %v161, %v159
    %v163 = vld [vmem:[%s2] sm:$0xff]
    %v164 = vld [vmem:[%s3] sm:$0x1]
    %165 = vset.pattern.permute.xlu0 0
    %166 = vperm.xlu0 %165, %v163
    %v167 = vpop.permute.xlu0 %166
    %v168 = vlaneseq
    %v169 = vshrl.u32 %v168, 7
    %v170 = vsub.s32 0, %v169
    %v171 = vrot.slane %v164, %v170
    %vm172 = vcmp.eq.s32.totalorder %v167, %v171
    %v173 = vsel %vm172, %v162, 0.0
    %vm174 = vcmask 64512
    %v175 = vsel %vm174, %v173, -inf
    %176 = vmax.xlane.f32.xlu0 %v175
    %v177 = vpop.xlane.xlu0 %176
    %v178 = vsel %vm172, 1e+30, %v162
    %v179 = vsel %vm174, %v178, inf
    %180 = vmin.xlane.f32.xlu0 %v179
    %v181 = vpop.xlane.xlu0 %180
    %vm182 = vcmask 7168
    %v183 = vsel %vm182, %v177, %v181
    %vm184 = vcmask 15360
    %185 = vst.msk [vmem:[%s4] sm:$0xff] %vm184, %v183
    // Predicated region
    $region22: #{tpu_custom_call.1} parent=1 // pred_check
      _
    $region23: #{tpu_custom_call.1} parent=1 // pred_check_branch
      %187 = sbr.rel (0) target = $region25
    $region24: #{tpu_custom_call.1} parent=1 // pred_region
      _
    $region25: #{tpu_custom_call.1} parent=1 // pred_fallthru
      _
    // Predicated region
    $region26: #{tpu_custom_call.1} parent=1 // pred_check
      _
    $region27: #{tpu_custom_call.1} parent=1 // pred_check_branch
      %189 = sbr.rel (0) target = $region29
    $region28: #{tpu_custom_call.1} parent=1 // pred_region
      _
    $region29: #{tpu_custom_call.1} parent=1 // pred_fallthru
      _
    %190 = vsyncpa [#allocation3], 1

</llo_original>
